<compile_context>
chip_gen: v5e
topology: v5e:2x2
jax: 0.10.0
libtpu: 0.0.40
codegen_flags: <defaults>
</compile_context>

<pallas_src>
import functools

import jax
import jax.numpy as jnp
from jax import lax
from jax.experimental import pallas as pl
from jax.experimental.pallas import tpu as pltpu

_EPS = 1e-7

# Per-buffer VMEM target, measured in f32-equivalent, padding-aware bytes.
# 2 MiB blocks -> double-buffered in+out (~8 MiB) + in-kernel f32 temporaries
# (<~4 MiB) fit under v5e's 16 MiB scoped default and well under v7x's 64 MiB
# physical VMEM; the explicit 32 MiB scoped limit below adds headroom.
_TARGET_BLOCK_BYTES = 2 * 1024 * 1024
# Floor (per-grid-step overhead ~0.35 us dominates tiny blocks) and a cap of
# ~total/8 so mid-sized tensors still get several pipelined grid steps.
_MIN_BLOCK_BYTES = 256 * 1024
_MIN_GRID_STEPS = 8
# 32 MiB: above v5e's 16 MiB scoped default, safely below v7x's 64 MiB VMEM.
_VMEM_LIMIT_BYTES = 32 * 1024 * 1024


def _round_up(v: int, m: int) -> int:
    return (v + m - 1) // m * m


def _block_budget(total_bytes: int) -> int:
    """Per-block byte budget: ~total/8, clamped to [256 KiB, 2 MiB]."""
    return min(_TARGET_BLOCK_BYTES,
               max(_MIN_BLOCK_BYTES, total_bytes // _MIN_GRID_STEPS))


def _lp_inv_norm(x_f32, power, axis):
    """1 / (||x||_p-style norm + eps), reduced over `axis` (f32 accumulate)."""
    if power == 2:
        s = jnp.sum(x_f32 * x_f32, axis=axis, keepdims=True)
        norm = jnp.sqrt(s)                       # EUP
    elif isinstance(power, int) and power > 0:
        # integer_pow stays on the VPU (no exp/log on the full block).
        s = jnp.sum(lax.integer_pow(x_f32, power), axis=axis, keepdims=True)
        norm = jnp.power(s, 1.0 / power)         # pow only on the reduced tensor
    else:
        s = jnp.sum(jnp.power(x_f32, power), axis=axis, keepdims=True)
        norm = jnp.power(s, 1.0 / power)
    # One full-precision reciprocal per output column (not per element); the
    # broadcast multiply happens in the caller. approx=True would miss the
    # 1e-5 reference tolerance.
    return pl.reciprocal(norm + _EPS, approx=False)


def _scale(x, inv, out_dtype):
    """Scale x by the (broadcast) reciprocal norm.

    f32 inputs scale in f32 (matches the reference exactly); narrower dtypes
    scale in the native dtype so no full-size f32 copy of the block stays live
    for the store (halves in-kernel VMEM temp footprint for bf16/fp8).
    """
    if x.dtype == jnp.float32:
        return (x * inv).astype(out_dtype)
    return (x * inv.astype(x.dtype)).astype(out_dtype)


def _normalize_kernel_chan(x_ref, o_ref, *, power: int):
    # x_ref / o_ref: (bn, C, hw_tile) block in VMEM; reduce over channel axis.
    x = x_ref[...]
    inv = _lp_inv_norm(x.astype(jnp.float32), power, axis=1)   # (bn, 1, hw_tile)
    o_ref[...] = _scale(x, inv, o_ref.dtype)


def _normalize_kernel_last(x_ref, o_ref, *, power: int):
    # x_ref / o_ref: (tile_n, C) block; reduce over the last (lane) axis so the
    # output block is lane-dense.
    x = x_ref[...]
    inv = _lp_inv_norm(x.astype(jnp.float32), power, axis=-1)  # (tile_n, 1)
    o_ref[...] = _scale(x, inv, o_ref.dtype)


def _normalize_2d(x: jax.Array, power: int) -> jax.Array:
    n, c = x.shape
    itemsize = jnp.dtype(x.dtype).itemsize
    comp_itemsize = max(itemsize, 4)                 # working set is f32
    sublane = max(8, 32 // max(1, min(itemsize, 4))) # 8 f32 / 16 bf16 / 32 int8
    per_row = _round_up(c, 128) * comp_itemsize      # lane-padded row bytes
    budget = _block_budget(n * per_row)

    if n * per_row <= budget:
        tile_n = n
    else:
        tile_n = min(n, max(sublane, (budget // per_row) // sublane * sublane))
    grid = (pl.cdiv(n, tile_n),)

    kernel = functools.partial(_normalize_kernel_last, power=power)
    return pl.pallas_call(
        kernel,
        out_shape=jax.ShapeDtypeStruct((n, c), x.dtype),
        grid_spec=pltpu.PrefetchScalarGridSpec(
            num_scalar_prefetch=0,
            grid=grid,
            in_specs=[pl.BlockSpec((tile_n, c), lambda i: (i, 0))],
            out_specs=pl.BlockSpec((tile_n, c), lambda i: (i, 0)),
        ),
        compiler_params=pltpu.CompilerParams(
            dimension_semantics=("parallel",),
            vmem_limit_bytes=_VMEM_LIMIT_BYTES),
    )(x)


def normalize(x: jax.Array, power: int = 2) -> jax.Array:
    """L_p normalize over dim 1 of an NCHW (or (N, C)) tensor, PyTorch-style."""
    orig_shape = x.shape
    if x.ndim < 2:
        raise ValueError("normalize expects at least 2 dims (N, C, ...)")
    if x.ndim == 2:
        return _normalize_2d(x, power)

    n, c = x.shape[0], x.shape[1]
    hw = 1
    for d in x.shape[2:]:
        hw *= d
    x3 = x.reshape(n, c, hw)

    itemsize = jnp.dtype(x.dtype).itemsize
    comp_itemsize = max(itemsize, 4)     # f32 temporaries dominate VMEM use
    padded_c = _round_up(c, 8)           # sublane padding of the f32 working set
    per_col = padded_c * comp_itemsize   # bytes per lane column of a block
    budget = _block_budget(n * hw * per_col)

    # Lane-axis tile: whole extent if it fits, else the largest 128-multiple
    # within budget. The cdiv grid masks the partial edge block, which is safe
    # because every output column depends only on its own input column.
    if hw * per_col <= budget:
        hw_tile = hw
    else:
        hw_tile = min(hw, max(128, (budget // per_col) // 128 * 128))

    # Fold batch elements into the block when the per-sample slab is small
    # (amortizes the ~0.35 us per-grid-step overhead); keep the leading axis
    # un-ragged.
    per_sample = per_col * hw_tile
    bn = min(n, max(1, budget // max(1, per_sample)))
    while n % bn:
        bn -= 1

    grid = (n // bn, pl.cdiv(hw, hw_tile))

    kernel = functools.partial(_normalize_kernel_chan, power=power)
    out3 = pl.pallas_call(
        kernel,
        out_shape=jax.ShapeDtypeStruct((n, c, hw), x.dtype),
        grid_spec=pltpu.PrefetchScalarGridSpec(
            num_scalar_prefetch=0,
            grid=grid,
            in_specs=[pl.BlockSpec((bn, c, hw_tile), lambda i, j: (i, 0, j))],
            out_specs=pl.BlockSpec((bn, c, hw_tile), lambda i, j: (i, 0, j)),
        ),
        compiler_params=pltpu.CompilerParams(
            dimension_semantics=("parallel", "parallel"),
            vmem_limit_bytes=_VMEM_LIMIT_BYTES),
    )(x3)

    return out3.reshape(orig_shape)


def _reference(x: jax.Array, power: int = 2) -> jax.Array:
    xf = x.astype(jnp.float32)
    norm = jnp.power(jnp.sum(jnp.power(xf, power), axis=1, keepdims=True),
                     1.0 / power)
    return (xf / (norm + _EPS)).astype(x.dtype)


if __name__ == "__main__":
    key = jax.random.PRNGKey(0)
    k1, k2 = jax.random.split(key)

    # Small NCHW input consistent with the module's usage in the GAN code.
    x = jax.random.normal(k1, (2, 4, 16, 16), dtype=jnp.float32)
    out = jax.block_until_ready(normalize(x, power=2))
    ref = _reference(x, power=2)
    assert out.shape == x.shape and out.dtype == x.dtype
    assert jnp.allclose(out, ref, atol=1e-5, rtol=1e-5), "NCHW mismatch vs reference"

    # 2-D (features) path: lane-dense layout, reduction over the last axis.
    x2 = jax.random.normal(k2, (8, 256), dtype=jnp.float32)
    out2 = jax.block_until_ready(normalize(x2, power=2))
    ref2 = _reference(x2, power=2)
    assert out2.shape == x2.shape and out2.dtype == x2.dtype
    assert jnp.allclose(out2, ref2, atol=1e-5, rtol=1e-5), "2D mismatch vs reference"

    print("KERNEL_OK")
</pallas_src>

<mosaic_0001>
module attributes {stable_mosaic.version = 11 : i64} {
  func.func @_normalize_kernel_chan(%arg0: i32, %arg1: i32, %arg2: memref<2x4x256xf32, #tpu.memory_space<vmem>>, %arg3: memref<2x4x256xf32, #tpu.memory_space<vmem>>) attributes {dimension_semantics = [#tpu.dimension_semantics<parallel>, #tpu.dimension_semantics<parallel>], iteration_bounds = array<i64: 1, 1>, scalar_prefetch = 0 : i64, scratch_operands = 0 : i64, tpu.core_type = #tpu.core_type<tc>, window_params = [{transform_indices = @transform_0, window_bounds = array<i64: 2, 4, 256>}, {transform_indices = @transform_1, window_bounds = array<i64: 2, 4, 256>}]} {
    %c0 = arith.constant 0 : index
    %c0_0 = arith.constant 0 : index
    %c0_1 = arith.constant 0 : index
    %0 = vector.load %arg2[%c0, %c0_0, %c0_1] : memref<2x4x256xf32, #tpu.memory_space<vmem>>, vector<2x4x256xf32>
    %1 = arith.mulf %0, %0 : vector<2x4x256xf32>
    %cst = arith.constant dense<0.000000e+00> : vector<2x256xf32>
    %2 = vector.multi_reduction <add>, %1, %cst [1] : vector<2x4x256xf32> to vector<2x256xf32>
    %3 = vector.shape_cast %2 : vector<2x256xf32> to vector<2x1x256xf32>
    %4 = math.sqrt %3 : vector<2x1x256xf32>
    %cst_2 = arith.constant 1.000000e-07 : f32
    %5 = vector.broadcast %cst_2 : f32 to vector<2x1x256xf32>
    %6 = arith.addf %4, %5 : vector<2x1x256xf32>
    %7 = tpu.reciprocal %6 : vector<2x1x256xf32> -> vector<2x1x256xf32>
    %8 = vector.broadcast %7 : vector<2x1x256xf32> to vector<2x4x256xf32>
    %9 = arith.mulf %0, %8 : vector<2x4x256xf32>
    %c0_3 = arith.constant 0 : index
    %c0_4 = arith.constant 0 : index
    %c0_5 = arith.constant 0 : index
    %10 = vector.load %arg3[%c0_3, %c0_4, %c0_5] : memref<2x4x256xf32, #tpu.memory_space<vmem>>, vector<2x4x256xf32>
    tpu.vector_store %arg3[%c0_3, %c0_4, %c0_5], %9 {strides = array<i32>} : memref<2x4x256xf32, #tpu.memory_space<vmem>>, vector<2x4x256xf32>,
    return
  }
  func.func @transform_0(%arg0: i32, %arg1: i32) -> (i32, i32, i32) {
    %c0_i32 = arith.constant 0 : i32
    %c0_i32_0 = arith.constant 0 : i32
    return %arg0, %c0_i32, %arg1 : i32, i32, i32
  }
  func.func @transform_1(%arg0: i32, %arg1: i32) -> (i32, i32, i32) {
    %c0_i32 = arith.constant 0 : i32
    %c0_i32_0 = arith.constant 0 : i32
    return %arg0, %c0_i32, %arg1 : i32, i32, i32
  }
}

</mosaic_0001>

<llo_original>
// kernel: tpu_custom_call.1
$region0: #{tpu_custom_call.1}
  #allocation0 [shape = 'u32[]', space=smem, size = 0x4, offset = 0x4, fixed_abs, tag = 'smem constant byte address 0x4 - core index']
  #allocation1 [shape = 'u32[72,128]{1,0:T(1,128)}', space=vmem, size = 0x9000, scoped, tag = 'internal scratch']
  %s0 = inlined_call_operand.hbm [shape: f32[2,4,256], index: 0, kind: input, shape index: {}]
  %s1 = inlined_call_operand.hbm [shape: f32[2,4,256], index: 1, kind: output, shape index: {}]
  %s2 = sld [smem:[#allocation0]]
  $region18: #{tpu_custom_call.1} parent=0
    _
  %s4 = ssub.s32 1, %s2
  %s5 = scalar_select 0, %s4, %s2
  $region1: #{tpu_custom_call.1} parent=0
    #allocation2 [shape = 'u8[8192]{0}', space=vmem, size = 0x2000, scoped, tag = 'input window, operand 0, single buffered']
    #allocation3 [shape = 's32[1]{0}', space=sflag, size = 0x4, scoped, tag = 'scoped memory for tpu_custom_call.1']
    #allocation4 [shape = 's32[1]{0}', space=sflag, size = 0x4, scoped, tag = 'scoped memory for tpu_custom_call.1']
    #allocation5 [shape = 'u8[8192]{0}', space=vmem, size = 0x2000, scoped, tag = 'output window, operand 0, single buffered']
    %6 = vsyncpa [#allocation3], 0
    %7 = vsyncpa [#allocation4], 0
    // Predicated region
    $region2: #{tpu_custom_call.1} parent=1 // pred_check
      _
    $region3: #{tpu_custom_call.1} parent=1 // pred_check_branch
      %9 = sbr.rel (0) target = $region5
    $region4: #{tpu_custom_call.1} parent=1 // pred_region
      %11 = vsyncadd [#allocation3], 0
      %s12 = sshll.u32 %s0, 4
      %s13 = int_to_ptr.hbm [resolvable:$true] %s12
      %s14 = sshll.u32 [#allocation2], 4
      %s15 = int_to_ptr.vmem [resolvable:$true] %s14
      %20 = dma.hbm_to_vmem [thread:$0]  %s13, 256, %s15, [#allocation3], 128, 128, 8
    $region5: #{tpu_custom_call.1} parent=1 // pred_fallthru
      _
    // Predicated region
    $region6: #{tpu_custom_call.1} parent=1 // pred_check
      _
    $region7: #{tpu_custom_call.1} parent=1 // pred_check_branch
      %22 = sbr.rel (0) target = $region9
    $region8: #{tpu_custom_call.1} parent=1 // pred_region
      %24 = dma.done [#allocation3], 256
    $region9: #{tpu_custom_call.1} parent=1 // pred_fallthru
      _
    %v25 = vld [vmem:[#allocation2] sm:$0xff]
    %v26 = vld [vmem:[#allocation2 + $0x8] sm:$0xff]
    %v27 = vmul.f32 %v25, %v25
    %v28 = vmul.f32 %v26, %v26
    %31 = vst [vmem:[#allocation1] ss:$2 sm:$0xff] %v27
    %v32 = vld.sshfl [vmem:[#allocation1] sm:$0xff pattern:$0x75316420]
    %v33 = vld.sshfl [vmem:[#allocation1 + $0x8] sm:$0xff pattern:$0x75316420]
    %s34 = scalar_lea.vmem [#allocation1], 16
    %35 = vst [vmem:[%s34] ss:$2 sm:$0xff] %v28
    %v36 = vld.sshfl [vmem:[#allocation1 + $0x10] sm:$0xff pattern:$0x75316420]
    %v37 = vld.sshfl [vmem:[#allocation1 + $0x18] sm:$0xff pattern:$0x75316420]
    %vm42 = vcmask 1043456
    %v43 = vsel %vm42, %v32, 0.0
    %v44 = vrot.slane %v43, 4
    %v45 = vadd.f32 %v43, %v44
    %v46 = vrot.slane %v45, 2
    %v47 = vadd.f32 %v45, %v46
    %v48 = vrot.slane %v47, 1
    %v49 = vadd.f32 %v47, %v48
    %v50 = vsel %vm42, %v33, 0.0
    %v51 = vrot.slane %v50, 4
    %v52 = vadd.f32 %v50, %v51
    %v53 = vrot.slane %v52, 2
    %v54 = vadd.f32 %v52, %v53
    %v55 = vrot.slane %v54, 1
    %v56 = vadd.f32 %v54, %v55
    %v57 = vsel %vm42, %v36, 0.0
    %v58 = vrot.slane %v57, 4
    %v59 = vadd.f32 %v57, %v58
    %v60 = vrot.slane %v59, 2
    %v61 = vadd.f32 %v59, %v60
    %v62 = vrot.slane %v61, 1
    %v63 = vadd.f32 %v61, %v62
    %v64 = vsel %vm42, %v37, 0.0
    %v65 = vrot.slane %v64, 4
    %v66 = vadd.f32 %v64, %v65
    %v67 = vrot.slane %v66, 2
    %v68 = vadd.f32 %v66, %v67
    %v69 = vrot.slane %v68, 1
    %v70 = vadd.f32 %v68, %v69
    %v71 = vrsqrt.pop %v49
    %v72 = vmul.f32 %v71, %v49
    %v73 = vmul.f32 %v72, %v71
    %v74 = vmul.f32 0.5, %v73
    %v75 = vsub.f32 1.5, %v74
    %v76 = vmul.f32 %v71, %v75
    %v77 = vmul.f32 %v49, %v76
    %vm78 = vcmp.eq.f32.partialorder %v49, inf
    %v79 = vsel %vm78, %v49, %v77
    %vm80 = vcmp.eq.f32.partialorder %v49, 0.0
    %v81 = vand.u32 %v49, 2147483648
    %v82 = vsel %vm80, %v81, %v79
    %v83 = vrsqrt.pop %v56
    %v84 = vmul.f32 %v83, %v56
    %v85 = vmul.f32 %v84, %v83
    %v86 = vmul.f32 0.5, %v85
    %v87 = vsub.f32 1.5, %v86
    %v88 = vmul.f32 %v83, %v87
    %v89 = vmul.f32 %v56, %v88
    %vm90 = vcmp.eq.f32.partialorder %v56, inf
    %v91 = vsel %vm90, %v56, %v89
    %vm92 = vcmp.eq.f32.partialorder %v56, 0.0
    %v93 = vand.u32 %v56, 2147483648
    %v94 = vsel %vm92, %v93, %v91
    %v95 = vrsqrt.pop %v63
    %v96 = vmul.f32 %v95, %v63
    %v97 = vmul.f32 %v96, %v95
    %v98 = vmul.f32 0.5, %v97
    %v99 = vsub.f32 1.5, %v98
    %v100 = vmul.f32 %v95, %v99
    %v101 = vmul.f32 %v63, %v100
    %vm102 = vcmp.eq.f32.partialorder %v63, inf
    %v103 = vsel %vm102, %v63, %v101
    %vm104 = vcmp.eq.f32.partialorder %v63, 0.0
    %v105 = vand.u32 %v63, 2147483648
    %v106 = vsel %vm104, %v105, %v103
    %v107 = vrsqrt.pop %v70
    %v108 = vmul.f32 %v107, %v70
    %v109 = vmul.f32 %v108, %v107
    %v110 = vmul.f32 0.5, %v109
    %v111 = vsub.f32 1.5, %v110
    %v112 = vmul.f32 %v107, %v111
    %v113 = vmul.f32 %v70, %v112
    %vm114 = vcmp.eq.f32.partialorder %v70, inf
    %v115 = vsel %vm114, %v70, %v113
    %vm116 = vcmp.eq.f32.partialorder %v70, 0.0
    %v117 = vand.u32 %v70, 2147483648
    %v118 = vsel %vm116, %v117, %v115
    %v119 = vadd.f32 %v82, 1e-07
    %v120 = vadd.f32 %v94, 1e-07
    %v121 = vadd.f32 %v106, 1e-07
    %v122 = vadd.f32 %v118, 1e-07
    %v123 = vrcp.pop %v119
    %v124 = vmul.f32 %v119, %v123
    %v125 = vsub.f32 1.0, %v124
    %v126 = vmul.f32 %v123, %v125
    %v127 = vadd.f32 %v123, %v126
    %vm128 = vweird.f32 %v119
    %vm129 = vweird.f32 %v123
    %vm130 = vmor %vm128, %vm129
    %v131 = vsel %vm130, %v123, %v127
    %v132 = vand.u32 2147483647, %v119
    %vm133 = vcmp.eq.f32.partialorder %v132, 8.507059e+37
    %v134 = vand.u32 %v119, 2147483648
    %v135 = vor.u32 1.1754944e-38, %v134
    %v136 = vsel %vm133, %v135, %v131
    %v137 = vrcp.pop %v120
    %v138 = vmul.f32 %v120, %v137
    %v139 = vsub.f32 1.0, %v138
    %v140 = vmul.f32 %v137, %v139
    %v141 = vadd.f32 %v137, %v140
    %vm142 = vweird.f32 %v120
    %vm143 = vweird.f32 %v137
    %vm144 = vmor %vm142, %vm143
    %v145 = vsel %vm144, %v137, %v141
    %v146 = vand.u32 2147483647, %v120
    %vm147 = vcmp.eq.f32.partialorder %v146, 8.507059e+37
    %v148 = vand.u32 %v120, 2147483648
    %v149 = vor.u32 1.1754944e-38, %v148
    %v150 = vsel %vm147, %v149, %v145
    %v151 = vrcp.pop %v121
    %v152 = vmul.f32 %v121, %v151
    %v153 = vsub.f32 1.0, %v152
    %v154 = vmul.f32 %v151, %v153
    %v155 = vadd.f32 %v151, %v154
    %vm156 = vweird.f32 %v121
    %vm157 = vweird.f32 %v151
    %vm158 = vmor %vm156, %vm157
    %v159 = vsel %vm158, %v151, %v155
    %v160 = vand.u32 2147483647, %v121
    %vm161 = vcmp.eq.f32.partialorder %v160, 8.507059e+37
    %v162 = vand.u32 %v121, 2147483648
    %v163 = vor.u32 1.1754944e-38, %v162
    %v164 = vsel %vm161, %v163, %v159
    %v165 = vrcp.pop %v122
    %v166 = vmul.f32 %v122, %v165
    %v167 = vsub.f32 1.0, %v166
    %v168 = vmul.f32 %v165, %v167
    %v169 = vadd.f32 %v165, %v168
    %vm170 = vweird.f32 %v122
    %vm171 = vweird.f32 %v165
    %vm172 = vmor %vm170, %vm171
    %v173 = vsel %vm172, %v165, %v169
    %v174 = vand.u32 2147483647, %v122
    %vm175 = vcmp.eq.f32.partialorder %v174, 8.507059e+37
    %v176 = vand.u32 %v122, 2147483648
    %v177 = vor.u32 1.1754944e-38, %v176
    %v178 = vsel %vm175, %v177, %v173
    %v183 = vrot.slane %v150, 4
    %v184 = vrot.slane %v178, 4
    %v185 = vsel %vm42, %v136, %v183
    %v186 = vsel %vm42, %v164, %v184
    %v189 = vmul.f32 %v25, %v185
    %v190 = vmul.f32 %v26, %v186
    %191 = vst [vmem:[#allocation5] sm:$0xff] %v189
    %192 = vst [vmem:[#allocation5 + $0x8] sm:$0xff] %v190
    // Predicated region
    $region10: #{tpu_custom_call.1} parent=1 // pred_check
      _
    $region11: #{tpu_custom_call.1} parent=1 // pred_check_branch
      %194 = sbr.rel (0) target = $region13
    $region12: #{tpu_custom_call.1} parent=1 // pred_region
      %196 = vsyncadd [#allocation4], 0
      %s197 = sshll.u32 [#allocation5], 4
      %s198 = int_to_ptr.vmem [resolvable:$true] %s197
      %s199 = sshll.u32 %s1, 4
      %s200 = int_to_ptr.hbm [resolvable:$true] %s199
      %205 = dma.vmem_to_hbm [thread:$0]  %s198, 256, %s200, [#allocation4], 128, 128, 8
    $region13: #{tpu_custom_call.1} parent=1 // pred_fallthru
      _
    // Predicated region
    $region14: #{tpu_custom_call.1} parent=1 // pred_check
      _
    $region15: #{tpu_custom_call.1} parent=1 // pred_check_branch
      %207 = sbr.rel (0) target = $region17
    $region16: #{tpu_custom_call.1} parent=1 // pred_region
      %209 = dma.done [#allocation4], 256
    $region17: #{tpu_custom_call.1} parent=1 // pred_fallthru
      _
    %210 = vsyncpa [#allocation3], 1
    %211 = vsyncpa [#allocation4], 1

</llo_original>
